<compile_context>
chip_gen: v5e
topology: v5e:2x2
jax: 0.10.0
libtpu: 0.0.40
codegen_flags: <defaults>
</compile_context>

<pallas_src>
import jax
import jax.numpy as jnp
from jax.experimental import pallas as pl
from jax.experimental.pallas import tpu as pltpu


def critic_kernel(x_ref, w1_ref, b1_ref, w2_ref, b2_ref, w3_ref, b3_ref, o_ref):
    # x_ref: (tb, D) native layout.  Compute transposed (h = W @ x^T) so the
    # batch lives on lanes and the value head emits a lane-dense (1, tb) row.
    x = x_ref[...]

    # fc1 + ReLU: contract w1 (H, D) with x (tb, D) over D -> (H, tb) on the MXU.
    # TODO(synk): optional bf16 fast path for the two MXU matmuls (halves the x
    # HBM read); kept f32 here to preserve the 1e-4/1e-3 tolerance check.
    h1 = jax.lax.dot_general(
        w1_ref[...], x,
        dimension_numbers=(((1,), (1,)), ((), ())),
        preferred_element_type=jnp.float32)
    h1 = jnp.maximum(h1 + b1_ref[...], 0.0)                      # (H, tb)

    # fc2 + ReLU
    h2 = jnp.dot(w2_ref[...], h1, preferred_element_type=jnp.float32)
    h2 = jnp.maximum(h2 + b2_ref[...], 0.0)                      # (H, tb)

    # fc3 (128 -> 1): VPU multiply + sublane reduce; lane-dense (1, tb) output.
    out = jnp.sum(w3_ref[...] * h2, axis=0, keepdims=True)       # (1, tb)
    o_ref[...] = (out + b3_ref[0]).astype(o_ref.dtype)


def _pick_batch_tile(B):
    """Return (tb, Bp): batch tile (multiple of 128) and padded batch size."""
    n = pl.cdiv(B, 128)                  # number of 128-lane batch chunks
    Bp = 128 * n
    if n <= 1:
        return 128, Bp                   # small-batch latency path: pad to 128 only
    # Cap tiles at 512 lanes and keep >= 2 grid steps (v7x has 2 TensorCores).
    max_chunks = min(4, n // 2)
    chunks = max(c for c in range(1, max_chunks + 1) if n % c == 0)
    return 128 * chunks, Bp


def critic_forward(x, params, tb=None):
    w1, b1, w2, b2, w3, b3 = params      # PyTorch shapes: W (out, in), b (out,)
    B, D = x.shape
    H = w1.shape[0]                      # 128

    auto_tb, Bp = _pick_batch_tile(B)
    if tb is None:
        tb = auto_tb
    Bp = tb * pl.cdiv(Bp, tb)            # re-pad if the caller forced a tile

    if Bp != B:
        # Pad batch only (zeros); padded rows are sliced off after the kernel.
        x = jnp.pad(x, ((0, Bp - B), (0, 0)))

    # Constant-index specs: block stays VMEM-resident across all grid steps.
    resident = lambda shape: pl.BlockSpec(shape, lambda i: (0, 0))

    out = pl.pallas_call(
        critic_kernel,
        out_shape=jax.ShapeDtypeStruct((1, Bp), jnp.float32),
        grid=(Bp // tb,),
        in_specs=[
            pl.BlockSpec((tb, D), lambda i: (i, 0)),             # x streams, native layout
            resident((H, D)),                                     # w1
            resident((H, 1)),                                     # b1
            resident((H, H)),                                     # w2
            resident((H, 1)),                                     # b2
            resident((H, 1)),                                     # w3 (as column)
            pl.BlockSpec(memory_space=pltpu.MemorySpace.SMEM),    # b3 scalar
        ],
        out_specs=pl.BlockSpec((1, tb), lambda i: (0, i)),
        compiler_params=pltpu.CompilerParams(
            dimension_semantics=("parallel",)),                   # 2 TCs on v7x
    )(
        x,
        w1, b1.reshape(H, 1),
        w2, b2.reshape(H, 1),
        w3.reshape(H, 1),
        b3.reshape(1),
    )
    return out[0, :B].reshape(B, 1)


def init_params(key, input_size, hidden=128):
    # Deterministic init mimicking PyTorch nn.Linear default (uniform +-1/sqrt(fan_in)),
    # stored in PyTorch convention: W (out, in), b (out,).
    ks = jax.random.split(key, 6)

    def lin(kw, kb, fan_in, fan_out):
        bound = 1.0 / jnp.sqrt(jnp.float32(fan_in))
        w = jax.random.uniform(kw, (fan_out, fan_in), jnp.float32, -bound, bound)
        b = jax.random.uniform(kb, (fan_out,), jnp.float32, -bound, bound)
        return w, b

    w1, b1 = lin(ks[0], ks[1], input_size, hidden)
    w2, b2 = lin(ks[2], ks[3], hidden, hidden)
    w3, b3 = lin(ks[4], ks[5], hidden, 1)
    return (w1, b1, w2, b2, w3, b3)


def critic_ref(x, params):
    # Pure-JAX reference matching the PyTorch module (x @ W^T + b), full precision.
    w1, b1, w2, b2, w3, b3 = params
    hp = jax.lax.Precision.HIGHEST
    h1 = jnp.maximum(jnp.dot(x, w1.T, precision=hp) + b1, 0.0)
    h2 = jnp.maximum(jnp.dot(h1, w2.T, precision=hp) + b2, 0.0)
    return jnp.dot(h2, w3.T, precision=hp) + b3


if __name__ == "__main__":
    key = jax.random.PRNGKey(0)
    k_x, k_p = jax.random.split(key)

    batch = 8
    input_size = 64  # e.g. a small flattened minesweeper board state

    x = jax.random.normal(k_x, (batch, input_size), dtype=jnp.float32)
    params = init_params(k_p, input_size)

    out = jax.jit(critic_forward)(x, params)
    out = jax.block_until_ready(out)

    ref = critic_ref(x, params)
    assert out.shape == (batch, 1)
    assert jnp.allclose(out, ref, atol=1e-4, rtol=1e-3), "mismatch vs pure-JAX reference"

    print("KERNEL_OK")
</pallas_src>

<mosaic_0001>
module attributes {stable_mosaic.version = 11 : i64} {
  func.func @critic_kernel(%arg0: i32, %arg1: memref<128x64xf32, #tpu.memory_space<vmem>>, %arg2: memref<128x64xf32, #tpu.memory_space<vmem>>, %arg3: memref<128x1xf32, #tpu.memory_space<vmem>>, %arg4: memref<128x128xf32, #tpu.memory_space<vmem>>, %arg5: memref<128x1xf32, #tpu.memory_space<vmem>>, %arg6: memref<128x1xf32, #tpu.memory_space<vmem>>, %arg7: memref<1xf32, #tpu.memory_space<smem>>, %arg8: memref<1x128xf32, #tpu.memory_space<vmem>>) attributes {dimension_semantics = [#tpu.dimension_semantics<parallel>], iteration_bounds = array<i64: 1>, scalar_prefetch = 0 : i64, scratch_operands = 0 : i64, tpu.core_type = #tpu.core_type<tc>, window_params = [{transform_indices = @transform_0, window_bounds = array<i64: 128, 64>}, {pipeline_mode = #tpu.pipeline_mode<synchronous>, transform_indices = @transform_1, window_bounds = array<i64: 128, 64>}, {pipeline_mode = #tpu.pipeline_mode<synchronous>, transform_indices = @transform_2, window_bounds = array<i64: 128, 1>}, {pipeline_mode = #tpu.pipeline_mode<synchronous>, transform_indices = @transform_3, window_bounds = array<i64: 128, 128>}, {pipeline_mode = #tpu.pipeline_mode<synchronous>, transform_indices = @transform_4, window_bounds = array<i64: 128, 1>}, {pipeline_mode = #tpu.pipeline_mode<synchronous>, transform_indices = @transform_5, window_bounds = array<i64: 128, 1>}, {transform_indices = @transform_6, window_bounds = array<i64: 1>}, {transform_indices = @transform_7, window_bounds = array<i64: 1, 128>}]} {
    %c0 = arith.constant 0 : index
    %c0_0 = arith.constant 0 : index
    %0 = vector.load %arg1[%c0, %c0_0] : memref<128x64xf32, #tpu.memory_space<vmem>>, vector<128x64xf32>
    %c0_1 = arith.constant 0 : index
    %c0_2 = arith.constant 0 : index
    %1 = vector.load %arg2[%c0_1, %c0_2] : memref<128x64xf32, #tpu.memory_space<vmem>>, vector<128x64xf32>
    %cst = arith.constant dense<0.000000e+00> : vector<128x128xf32>
    %2 = tpu.matmul %1, %0, %cst {dimension_numbers = #tpu.dot_dimension_numbers<[1], [1], [0], [0], [0, 0, 1, 0], [], []>} : vector<128x64xf32>, vector<128x64xf32>, vector<128x128xf32> -> vector<128x128xf32>
    %c0_3 = arith.constant 0 : index
    %c0_4 = arith.constant 0 : index
    %3 = vector.load %arg3[%c0_3, %c0_4] : memref<128x1xf32, #tpu.memory_space<vmem>>, vector<128x1xf32>
    %4 = vector.broadcast %3 : vector<128x1xf32> to vector<128x128xf32>
    %5 = arith.addf %2, %4 : vector<128x128xf32>
    %cst_5 = arith.constant 0.000000e+00 : f32
    %6 = vector.broadcast %cst_5 : f32 to vector<128x128xf32>
    %7 = arith.maximumf %5, %6 : vector<128x128xf32>
    %c0_6 = arith.constant 0 : index
    %c0_7 = arith.constant 0 : index
    %8 = vector.load %arg4[%c0_6, %c0_7] : memref<128x128xf32, #tpu.memory_space<vmem>>, vector<128x128xf32>
    %cst_8 = arith.constant dense<0.000000e+00> : vector<128x128xf32>
    %9 = tpu.matmul %8, %7, %cst_8 {dimension_numbers = #tpu.dot_dimension_numbers<[1], [0], [0], [1], [0, 0, 1, 1], [], []>} : vector<128x128xf32>, vector<128x128xf32>, vector<128x128xf32> -> vector<128x128xf32>
    %c0_9 = arith.constant 0 : index
    %c0_10 = arith.constant 0 : index
    %10 = vector.load %arg5[%c0_9, %c0_10] : memref<128x1xf32, #tpu.memory_space<vmem>>, vector<128x1xf32>
    %11 = vector.broadcast %10 : vector<128x1xf32> to vector<128x128xf32>
    %12 = arith.addf %9, %11 : vector<128x128xf32>
    %cst_11 = arith.constant 0.000000e+00 : f32
    %13 = vector.broadcast %cst_11 : f32 to vector<128x128xf32>
    %14 = arith.maximumf %12, %13 : vector<128x128xf32>
    %c0_12 = arith.constant 0 : index
    %c0_13 = arith.constant 0 : index
    %15 = vector.load %arg6[%c0_12, %c0_13] : memref<128x1xf32, #tpu.memory_space<vmem>>, vector<128x1xf32>
    %16 = vector.broadcast %15 : vector<128x1xf32> to vector<128x128xf32>
    %17 = arith.mulf %16, %14 : vector<128x128xf32>
    %cst_14 = arith.constant dense<0.000000e+00> : vector<128xf32>
    %18 = vector.multi_reduction <add>, %17, %cst_14 [0] : vector<128x128xf32> to vector<128xf32>
    %19 = vector.shape_cast %18 : vector<128xf32> to vector<1x128xf32>
    %c0_15 = arith.constant 0 : index
    %20 = memref.load %arg7[%c0_15] : memref<1xf32, #tpu.memory_space<smem>>
    %21 = vector.broadcast %20 : f32 to vector<1x128xf32>
    %22 = arith.addf %19, %21 : vector<1x128xf32>
    %c0_16 = arith.constant 0 : index
    %c0_17 = arith.constant 0 : index
    %23 = vector.load %arg8[%c0_16, %c0_17] : memref<1x128xf32, #tpu.memory_space<vmem>>, vector<1x128xf32>
    tpu.vector_store %arg8[%c0_16, %c0_17], %22 {strides = array<i32>} : memref<1x128xf32, #tpu.memory_space<vmem>>, vector<1x128xf32>,
    return
  }
  func.func @transform_0(%arg0: i32) -> (i32, i32) {
    %c0_i32 = arith.constant 0 : i32
    %c0_i32_0 = arith.constant 0 : i32
    return %arg0, %c0_i32 : i32, i32
  }
  func.func @transform_1(%arg0: i32) -> (i32, i32) {
    %c0_i32 = arith.constant 0 : i32
    %c0_i32_0 = arith.constant 0 : i32
    %c0_i32_1 = arith.constant 0 : i32
    return %c0_i32, %c0_i32_0 : i32, i32
  }
  func.func @transform_2(%arg0: i32) -> (i32, i32) {
    %c0_i32 = arith.constant 0 : i32
    %c0_i32_0 = arith.constant 0 : i32
    %c0_i32_1 = arith.constant 0 : i32
    return %c0_i32, %c0_i32_0 : i32, i32
  }
  func.func @transform_3(%arg0: i32) -> (i32, i32) {
    %c0_i32 = arith.constant 0 : i32
    %c0_i32_0 = arith.constant 0 : i32
    %c0_i32_1 = arith.constant 0 : i32
    return %c0_i32, %c0_i32_0 : i32, i32
  }
  func.func @transform_4(%arg0: i32) -> (i32, i32) {
    %c0_i32 = arith.constant 0 : i32
    %c0_i32_0 = arith.constant 0 : i32
    %c0_i32_1 = arith.constant 0 : i32
    return %c0_i32, %c0_i32_0 : i32, i32
  }
  func.func @transform_5(%arg0: i32) -> (i32, i32) {
    %c0_i32 = arith.constant 0 : i32
    %c0_i32_0 = arith.constant 0 : i32
    %c0_i32_1 = arith.constant 0 : i32
    return %c0_i32, %c0_i32_0 : i32, i32
  }
  func.func @transform_6(%arg0: i32) -> i32 {
    %c0_i32 = arith.constant 0 : i32
    %c0_i32_0 = arith.constant 0 : i32
    return %c0_i32 : i32
  }
  func.func @transform_7(%arg0: i32) -> (i32, i32) {
    %c0_i32 = arith.constant 0 : i32
    %c0_i32_0 = arith.constant 0 : i32
    return %c0_i32, %arg0 : i32, i32
  }
}

</mosaic_0001>

<llo_original>
// kernel: critic_forward.1
$region0: #{critic_forward.1}
  #allocation0 [shape = 'u32[]', space=smem, size = 0x4, offset = 0x4, fixed_abs, tag = 'smem constant byte address 0x4 - core index']
  #allocation1 [shape = 'u32[72,128]{1,0:T(1,128)}', space=vmem, size = 0x9000, scoped, tag = 'internal scratch']
  #allocation2 [shape = 'f32[1]{0:T(128)S(6)}', space=smem, size = 0x200, scoped, tag = 'scoped memory for critic_forward.1']
  %s0 = inlined_call_operand.vmem [shape: f32[128,64], index: 0, kind: input, shape index: {}]
  %s1 = inlined_call_operand.vmem [shape: f32[128,64], index: 1, kind: input, shape index: {}]
  %s2 = inlined_call_operand.vmem [shape: f32[128,1], index: 2, kind: input, shape index: {}]
  %s3 = inlined_call_operand.vmem [shape: f32[128,128], index: 3, kind: input, shape index: {}]
  %s4 = inlined_call_operand.vmem [shape: f32[128,1], index: 4, kind: input, shape index: {}]
  %s5 = inlined_call_operand.vmem [shape: f32[128,1], index: 5, kind: input, shape index: {}]
  %s6 = inlined_call_operand.<no memory space> [shape: f32[1], index: 6, kind: input, shape index: {}]
  %s7 = inlined_call_operand.vmem [shape: f32[1,128], index: 7, kind: output, shape index: {}]
  %s8 = sld [smem:[#allocation0]]
  $region38: #{critic_forward.1} parent=0
    _
  %s10 = ssub.s32 1, %s8
  %s11 = scalar_select 0, %s10, %s8
  %12 = sst [smem:[#allocation2]] %s6
  // Predicated region
  $region2: #{critic_forward.1} parent=0 // pred_check
    _
  $region3: #{critic_forward.1} parent=0 // pred_check_branch
    %14 = sbr.rel (0) target = $region5
  $region4: #{critic_forward.1} parent=0 // pred_region
    _
  $region5: #{critic_forward.1} parent=0 // pred_fallthru
    _
  // Predicated region
  $region6: #{critic_forward.1} parent=0 // pred_check
    _
  $region7: #{critic_forward.1} parent=0 // pred_check_branch
    %16 = sbr.rel (0) target = $region9
  $region8: #{critic_forward.1} parent=0 // pred_region
    _
  $region9: #{critic_forward.1} parent=0 // pred_fallthru
    _
  // Predicated region
  $region10: #{critic_forward.1} parent=0 // pred_check
    _
  $region11: #{critic_forward.1} parent=0 // pred_check_branch
    %18 = sbr.rel (0) target = $region13
  $region12: #{critic_forward.1} parent=0 // pred_region
    _
  $region13: #{critic_forward.1} parent=0 // pred_fallthru
    _
  // Predicated region
  $region14: #{critic_forward.1} parent=0 // pred_check
    _
  $region15: #{critic_forward.1} parent=0 // pred_check_branch
    %20 = sbr.rel (0) target = $region17
  $region16: #{critic_forward.1} parent=0 // pred_region
    _
  $region17: #{critic_forward.1} parent=0 // pred_fallthru
    _
  // Predicated region
  $region18: #{critic_forward.1} parent=0 // pred_check
    _
  $region19: #{critic_forward.1} parent=0 // pred_check_branch
    %22 = sbr.rel (0) target = $region21
  $region20: #{critic_forward.1} parent=0 // pred_region
    _
  $region21: #{critic_forward.1} parent=0 // pred_fallthru
    _
  // Predicated region
  $region22: #{critic_forward.1} parent=0 // pred_check
    _
  $region23: #{critic_forward.1} parent=0 // pred_check_branch
    %24 = sbr.rel (0) target = $region25
  $region24: #{critic_forward.1} parent=0 // pred_region
    _
  $region25: #{critic_forward.1} parent=0 // pred_fallthru
    _
  // Predicated region
  $region26: #{critic_forward.1} parent=0 // pred_check
    _
  $region27: #{critic_forward.1} parent=0 // pred_check_branch
    %26 = sbr.rel (0) target = $region29
  $region28: #{critic_forward.1} parent=0 // pred_region
    _
  $region29: #{critic_forward.1} parent=0 // pred_fallthru
    _
  %v27 = vld [vmem:[%s0] sm:$0xff]
  %v28 = vld [vmem:[%s0 + $0x8] sm:$0xff]
  %v29 = vld [vmem:[%s0 + $0x10] sm:$0xff]
  %v30 = vld [vmem:[%s0 + $0x18] sm:$0xff]
  %v31 = vld [vmem:[%s0 + $0x20] sm:$0xff]
  %v32 = vld [vmem:[%s0 + $0x28] sm:$0xff]
  %v33 = vld [vmem:[%s0 + $0x30] sm:$0xff]
  %v34 = vld [vmem:[%s0 + $0x38] sm:$0xff]
  %v35 = vld [vmem:[%s0 + $0x40] sm:$0xff]
  %v36 = vld [vmem:[%s0 + $0x48] sm:$0xff]
  %v37 = vld [vmem:[%s0 + $0x50] sm:$0xff]
  %v38 = vld [vmem:[%s0 + $0x58] sm:$0xff]
  %v39 = vld [vmem:[%s0 + $0x60] sm:$0xff]
  %v40 = vld [vmem:[%s0 + $0x68] sm:$0xff]
  %v41 = vld [vmem:[%s0 + $0x70] sm:$0xff]
  %v42 = vld [vmem:[%s0 + $0x78] sm:$0xff]
  %v43 = vld [vmem:[%s1] sm:$0xff]
  %v44 = vld [vmem:[%s1 + $0x8] sm:$0xff]
  %v45 = vld [vmem:[%s1 + $0x10] sm:$0xff]
  %v46 = vld [vmem:[%s1 + $0x18] sm:$0xff]
  %v47 = vld [vmem:[%s1 + $0x20] sm:$0xff]
  %v48 = vld [vmem:[%s1 + $0x28] sm:$0xff]
  %v49 = vld [vmem:[%s1 + $0x30] sm:$0xff]
  %v50 = vld [vmem:[%s1 + $0x38] sm:$0xff]
  %v51 = vld [vmem:[%s1 + $0x40] sm:$0xff]
  %v52 = vld [vmem:[%s1 + $0x48] sm:$0xff]
  %v53 = vld [vmem:[%s1 + $0x50] sm:$0xff]
  %v54 = vld [vmem:[%s1 + $0x58] sm:$0xff]
  %v55 = vld [vmem:[%s1 + $0x60] sm:$0xff]
  %v56 = vld [vmem:[%s1 + $0x68] sm:$0xff]
  %v57 = vld [vmem:[%s1 + $0x70] sm:$0xff]
  %v58 = vld [vmem:[%s1 + $0x78] sm:$0xff]
  %v59 = vld [vmem:[%s2] sm:$0xff]
  %v60 = vld [vmem:[%s2 + $0x8] sm:$0xff]
  %v61 = vld [vmem:[%s2 + $0x10] sm:$0xff]
  %v62 = vld [vmem:[%s2 + $0x18] sm:$0xff]
  %v63 = vld [vmem:[%s2 + $0x20] sm:$0xff]
  %v64 = vld [vmem:[%s2 + $0x28] sm:$0xff]
  %v65 = vld [vmem:[%s2 + $0x30] sm:$0xff]
  %v66 = vld [vmem:[%s2 + $0x38] sm:$0xff]
  %v67 = vld [vmem:[%s2 + $0x40] sm:$0xff]
  %v68 = vld [vmem:[%s2 + $0x48] sm:$0xff]
  %v69 = vld [vmem:[%s2 + $0x50] sm:$0xff]
  %v70 = vld [vmem:[%s2 + $0x58] sm:$0xff]
  %v71 = vld [vmem:[%s2 + $0x60] sm:$0xff]
  %v72 = vld [vmem:[%s2 + $0x68] sm:$0xff]
  %v73 = vld [vmem:[%s2 + $0x70] sm:$0xff]
  %v74 = vld [vmem:[%s2 + $0x78] sm:$0xff]
  %76 = vset.pattern.permute.xlu0 0
  %77 = vperm.xlu0 %76, %v59
  %v78 = vpop.permute.xlu0 %77
  %81 = vset.pattern.permute.xlu0 0
  %82 = vperm.xlu0 %81, %v60
  %v83 = vpop.permute.xlu0 %82
  %86 = vset.pattern.permute.xlu0 0
  %87 = vperm.xlu0 %86, %v61
  %v88 = vpop.permute.xlu0 %87
  %91 = vset.pattern.permute.xlu0 0
  %92 = vperm.xlu0 %91, %v62
  %v93 = vpop.permute.xlu0 %92
  %96 = vset.pattern.permute.xlu0 0
  %97 = vperm.xlu0 %96, %v63
  %v98 = vpop.permute.xlu0 %97
  %101 = vset.pattern.permute.xlu0 0
  %102 = vperm.xlu0 %101, %v64
  %v103 = vpop.permute.xlu0 %102
  %106 = vset.pattern.permute.xlu0 0
  %107 = vperm.xlu0 %106, %v65
  %v108 = vpop.permute.xlu0 %107
  %111 = vset.pattern.permute.xlu0 0
  %112 = vperm.xlu0 %111, %v66
  %v113 = vpop.permute.xlu0 %112
  %116 = vset.pattern.permute.xlu0 0
  %117 = vperm.xlu0 %116, %v67
  %v118 = vpop.permute.xlu0 %117
  %121 = vset.pattern.permute.xlu0 0
  %122 = vperm.xlu0 %121, %v68
  %v123 = vpop.permute.xlu0 %122
  %126 = vset.pattern.permute.xlu0 0
  %127 = vperm.xlu0 %126, %v69
  %v128 = vpop.permute.xlu0 %127
  %131 = vset.pattern.permute.xlu0 0
  %132 = vperm.xlu0 %131, %v70
  %v133 = vpop.permute.xlu0 %132
  %136 = vset.pattern.permute.xlu0 0
  %137 = vperm.xlu0 %136, %v71
  %v138 = vpop.permute.xlu0 %137
  %141 = vset.pattern.permute.xlu0 0
  %142 = vperm.xlu0 %141, %v72
  %v143 = vpop.permute.xlu0 %142
  %146 = vset.pattern.permute.xlu0 0
  %147 = vperm.xlu0 %146, %v73
  %v148 = vpop.permute.xlu0 %147
  %151 = vset.pattern.permute.xlu0 0
  %152 = vperm.xlu0 %151, %v74
  %v153 = vpop.permute.xlu0 %152
  %vm155 = vcmask 523264
  %v157 = vsel %vm155, %v43, 0
  %v160 = vsel %vm155, %v44, 0
  %v163 = vsel %vm155, %v45, 0
  %v166 = vsel %vm155, %v46, 0
  %v169 = vsel %vm155, %v47, 0
  %v172 = vsel %vm155, %v48, 0
  %v175 = vsel %vm155, %v49, 0
  %v178 = vsel %vm155, %v50, 0
  %v181 = vsel %vm155, %v51, 0
  %v184 = vsel %vm155, %v52, 0
  %v187 = vsel %vm155, %v53, 0
  %v190 = vsel %vm155, %v54, 0
  %v193 = vsel %vm155, %v55, 0
  %v196 = vsel %vm155, %v56, 0
  %v199 = vsel %vm155, %v57, 0
  %v202 = vsel %vm155, %v58, 0
  %v205 = vsel %vm155, %v27, 0
  %v208 = vsel %vm155, %v28, 0
  %v211 = vsel %vm155, %v29, 0
  %v214 = vsel %vm155, %v30, 0
  %v217 = vsel %vm155, %v31, 0
  %v220 = vsel %vm155, %v32, 0
  %v223 = vsel %vm155, %v33, 0
  %v226 = vsel %vm155, %v34, 0
  %v229 = vsel %vm155, %v35, 0
  %v232 = vsel %vm155, %v36, 0
  %v235 = vsel %vm155, %v37, 0
  %v238 = vsel %vm155, %v38, 0
  %v241 = vsel %vm155, %v39, 0
  %v244 = vsel %vm155, %v40, 0
  %v247 = vsel %vm155, %v41, 0
  %v250 = vsel %vm155, %v42, 0
  %252 = vmatpush.xpose.msra.mxu0 %v250
  %253 = vmatpush.xpose.msra.mxu0 %v247
  %254 = vmatpush.xpose.msra.mxu0 %v244
  %255 = vmatpush.xpose.msra.mxu0 %v241
  %256 = vmatpush.xpose.msra.mxu0 %v238
  %257 = vmatpush.xpose.msra.mxu0 %v235
  %258 = vmatpush.xpose.msra.mxu0 %v232
  %259 = vmatpush.xpose.msra.mxu0 %v229
  %260 = vmatpush.xpose.msra.mxu0 %v226
  %261 = vmatpush.xpose.msra.mxu0 %v223
  %262 = vmatpush.xpose.msra.mxu0 %v220
  %263 = vmatpush.xpose.msra.mxu0 %v217
  %264 = vmatpush.xpose.msra.mxu0 %v214
  %265 = vmatpush.xpose.msra.mxu0 %v211
  %266 = vmatpush.xpose.msra.mxu0 %v208
  %267 = vmatpush.xpose.msra.mxu0 %v205
  %268 = vmatmul.f32.gmra.mxu0 %v157
  %v269 = vpop.f32.mrf.mxu0
  %v270 = vadd.f32 %v78, %v269
  %271 = vmatmul.f32.gmra.mxu0 %v160
  %v272 = vpop.f32.mrf.mxu0
  %v273 = vadd.f32 %v83, %v272
  %274 = vmatmul.f32.gmra.mxu0 %v163
  %v275 = vpop.f32.mrf.mxu0
  %v276 = vadd.f32 %v88, %v275
  %277 = vmatmul.f32.gmra.mxu0 %v166
  %v278 = vpop.f32.mrf.mxu0
  %v279 = vadd.f32 %v93, %v278
  %280 = vmatmul.f32.gmra.mxu0 %v169
  %v281 = vpop.f32.mrf.mxu0
  %v282 = vadd.f32 %v98, %v281
  %283 = vmatmul.f32.gmra.mxu0 %v172
  %v284 = vpop.f32.mrf.mxu0
  %v285 = vadd.f32 %v103, %v284
  %286 = vmatmul.f32.gmra.mxu0 %v175
  %v287 = vpop.f32.mrf.mxu0
  %v288 = vadd.f32 %v108, %v287
  %289 = vmatmul.f32.gmra.mxu0 %v178
  %v290 = vpop.f32.mrf.mxu0
  %v291 = vadd.f32 %v113, %v290
  %292 = vmatmul.f32.gmra.mxu0 %v181
  %v293 = vpop.f32.mrf.mxu0
  %v294 = vadd.f32 %v118, %v293
  %295 = vmatmul.f32.gmra.mxu0 %v184
  %v296 = vpop.f32.mrf.mxu0
  %v297 = vadd.f32 %v123, %v296
  %298 = vmatmul.f32.gmra.mxu0 %v187
  %v299 = vpop.f32.mrf.mxu0
  %v300 = vadd.f32 %v128, %v299
  %301 = vmatmul.f32.gmra.mxu0 %v190
  %v302 = vpop.f32.mrf.mxu0
  %v303 = vadd.f32 %v133, %v302
  %304 = vmatmul.f32.gmra.mxu0 %v193
  %v305 = vpop.f32.mrf.mxu0
  %v306 = vadd.f32 %v138, %v305
  %307 = vmatmul.f32.gmra.mxu0 %v196
  %v308 = vpop.f32.mrf.mxu0
  %v309 = vadd.f32 %v143, %v308
  %310 = vmatmul.f32.gmra.mxu0 %v199
  %v311 = vpop.f32.mrf.mxu0
  %v312 = vadd.f32 %v148, %v311
  %313 = vmatmul.f32.gmra.mxu0 %v202
  %v314 = vpop.f32.mrf.mxu0
  %v315 = vadd.f32 %v153, %v314
  %316 = vdwg.mxu0
  %v317 = vmax.f32 %v270, 0.0
  %v318 = vmax.f32 %v273, 0.0
  %v319 = vmax.f32 %v276, 0.0
  %v320 = vmax.f32 %v279, 0.0
  %v321 = vmax.f32 %v282, 0.0
  %v322 = vmax.f32 %v285, 0.0
  %v323 = vmax.f32 %v288, 0.0
  %v324 = vmax.f32 %v291, 0.0
  %v325 = vmax.f32 %v294, 0.0
  %v326 = vmax.f32 %v297, 0.0
  %v327 = vmax.f32 %v300, 0.0
  %v328 = vmax.f32 %v303, 0.0
  %v329 = vmax.f32 %v306, 0.0
  %v330 = vmax.f32 %v309, 0.0
  %v331 = vmax.f32 %v312, 0.0
  %v332 = vmax.f32 %v315, 0.0
  %v333 = vld [vmem:[%s3] sm:$0xff]
  %v334 = vld [vmem:[%s3 + $0x8] sm:$0xff]
  %v335 = vld [vmem:[%s3 + $0x10] sm:$0xff]
  %v336 = vld [vmem:[%s3 + $0x18] sm:$0xff]
  %v337 = vld [vmem:[%s3 + $0x20] sm:$0xff]
  %v338 = vld [vmem:[%s3 + $0x28] sm:$0xff]
  %v339 = vld [vmem:[%s3 + $0x30] sm:$0xff]
  %v340 = vld [vmem:[%s3 + $0x38] sm:$0xff]
  %v341 = vld [vmem:[%s3 + $0x40] sm:$0xff]
  %v342 = vld [vmem:[%s3 + $0x48] sm:$0xff]
  %v343 = vld [vmem:[%s3 + $0x50] sm:$0xff]
  %v344 = vld [vmem:[%s3 + $0x58] sm:$0xff]
  %v345 = vld [vmem:[%s3 + $0x60] sm:$0xff]
  %v346 = vld [vmem:[%s3 + $0x68] sm:$0xff]
  %v347 = vld [vmem:[%s3 + $0x70] sm:$0xff]
  %v348 = vld [vmem:[%s3 + $0x78] sm:$0xff]
  %v349 = vld [vmem:[%s4] sm:$0xff]
  %v350 = vld [vmem:[%s4 + $0x8] sm:$0xff]
  %v351 = vld [vmem:[%s4 + $0x10] sm:$0xff]
  %v352 = vld [vmem:[%s4 + $0x18] sm:$0xff]
  %v353 = vld [vmem:[%s4 + $0x20] sm:$0xff]
  %v354 = vld [vmem:[%s4 + $0x28] sm:$0xff]
  %v355 = vld [vmem:[%s4 + $0x30] sm:$0xff]
  %v356 = vld [vmem:[%s4 + $0x38] sm:$0xff]
  %v357 = vld [vmem:[%s4 + $0x40] sm:$0xff]
  %v358 = vld [vmem:[%s4 + $0x48] sm:$0xff]
  %v359 = vld [vmem:[%s4 + $0x50] sm:$0xff]
  %v360 = vld [vmem:[%s4 + $0x58] sm:$0xff]
  %v361 = vld [vmem:[%s4 + $0x60] sm:$0xff]
  %v362 = vld [vmem:[%s4 + $0x68] sm:$0xff]
  %v363 = vld [vmem:[%s4 + $0x70] sm:$0xff]
  %v364 = vld [vmem:[%s4 + $0x78] sm:$0xff]
  %366 = vset.pattern.permute.xlu0 0
  %367 = vperm.xlu0 %366, %v349
  %v368 = vpop.permute.xlu0 %367
  %371 = vset.pattern.permute.xlu0 0
  %372 = vperm.xlu0 %371, %v350
  %v373 = vpop.permute.xlu0 %372
  %376 = vset.pattern.permute.xlu0 0
  %377 = vperm.xlu0 %376, %v351
  %v378 = vpop.permute.xlu0 %377
  %381 = vset.pattern.permute.xlu0 0
  %382 = vperm.xlu0 %381, %v352
  %v383 = vpop.permute.xlu0 %382
  %386 = vset.pattern.permute.xlu0 0
  %387 = vperm.xlu0 %386, %v353
  %v388 = vpop.permute.xlu0 %387
  %391 = vset.pattern.permute.xlu0 0
  %392 = vperm.xlu0 %391, %v354
  %v393 = vpop.permute.xlu0 %392
  %396 = vset.pattern.permute.xlu0 0
  %397 = vperm.xlu0 %396, %v355
  %v398 = vpop.permute.xlu0 %397
  %401 = vset.pattern.permute.xlu0 0
  %402 = vperm.xlu0 %401, %v356
  %v403 = vpop.permute.xlu0 %402
  %406 = vset.pattern.permute.xlu0 0
  %407 = vperm.xlu0 %406, %v357
  %v408 = vpop.permute.xlu0 %407
  %411 = vset.pattern.permute.xlu0 0
  %412 = vperm.xlu0 %411, %v358
  %v413 = vpop.permute.xlu0 %412
  %416 = vset.pattern.permute.xlu0 0
  %417 = vperm.xlu0 %416, %v359
  %v418 = vpop.permute.xlu0 %417
  %421 = vset.pattern.permute.xlu0 0
  %422 = vperm.xlu0 %421, %v360
  %v423 = vpop.permute.xlu0 %422
  %426 = vset.pattern.permute.xlu0 0
  %427 = vperm.xlu0 %426, %v361
  %v428 = vpop.permute.xlu0 %427
  %431 = vset.pattern.permute.xlu0 0
  %432 = vperm.xlu0 %431, %v362
  %v433 = vpop.permute.xlu0 %432
  %436 = vset.pattern.permute.xlu0 0
  %437 = vperm.xlu0 %436, %v363
  %v438 = vpop.permute.xlu0 %437
  %441 = vset.pattern.permute.xlu0 0
  %442 = vperm.xlu0 %441, %v364
  %v443 = vpop.permute.xlu0 %442
  %445 = vmatpush.msra.mxu0 %v332
  %446 = vmatpush.msra.mxu0 %v331
  %447 = vmatpush.msra.mxu0 %v330
  %448 = vmatpush.msra.mxu0 %v329
  %449 = vmatpush.msra.mxu0 %v328
  %450 = vmatpush.msra.mxu0 %v327
  %451 = vmatpush.msra.mxu0 %v326
  %452 = vmatpush.msra.mxu0 %v325
  %453 = vmatpush.msra.mxu0 %v324
  %454 = vmatpush.msra.mxu0 %v323
  %455 = vmatpush.msra.mxu0 %v322
  %456 = vmatpush.msra.mxu0 %v321
  %457 = vmatpush.msra.mxu0 %v320
  %458 = vmatpush.msra.mxu0 %v319
  %459 = vmatpush.msra.mxu0 %v318
  %460 = vmatpush.msra.mxu0 %v317
  %461 = vmatmul.f32.gmra.mxu0 %v333
  %v462 = vpop.f32.mrf.mxu0
  %v463 = vadd.f32 %v368, %v462
  %464 = vmatmul.f32.gmra.mxu0 %v334
  %v465 = vpop.f32.mrf.mxu0
  %v466 = vadd.f32 %v373, %v465
  %467 = vmatmul.f32.gmra.mxu0 %v335
  %v468 = vpop.f32.mrf.mxu0
  %v469 = vadd.f32 %v378, %v468
  %470 = vmatmul.f32.gmra.mxu0 %v336
  %v471 = vpop.f32.mrf.mxu0
  %v472 = vadd.f32 %v383, %v471
  %473 = vmatmul.f32.gmra.mxu0 %v337
  %v474 = vpop.f32.mrf.mxu0
  %v475 = vadd.f32 %v388, %v474
  %476 = vmatmul.f32.gmra.mxu0 %v338
  %v477 = vpop.f32.mrf.mxu0
  %v478 = vadd.f32 %v393, %v477
  %479 = vmatmul.f32.gmra.mxu0 %v339
  %v480 = vpop.f32.mrf.mxu0
  %v481 = vadd.f32 %v398, %v480
  %482 = vmatmul.f32.gmra.mxu0 %v340
  %v483 = vpop.f32.mrf.mxu0
  %v484 = vadd.f32 %v403, %v483
  %485 = vmatmul.f32.gmra.mxu0 %v341
  %v486 = vpop.f32.mrf.mxu0
  %v487 = vadd.f32 %v408, %v486
  %488 = vmatmul.f32.gmra.mxu0 %v342
  %v489 = vpop.f32.mrf.mxu0
  %v490 = vadd.f32 %v413, %v489
  %491 = vmatmul.f32.gmra.mxu0 %v343
  %v492 = vpop.f32.mrf.mxu0
  %v493 = vadd.f32 %v418, %v492
  %494 = vmatmul.f32.gmra.mxu0 %v344
  %v495 = vpop.f32.mrf.mxu0
  %v496 = vadd.f32 %v423, %v495
  %497 = vmatmul.f32.gmra.mxu0 %v345
  %v498 = vpop.f32.mrf.mxu0
  %v499 = vadd.f32 %v428, %v498
  %500 = vmatmul.f32.gmra.mxu0 %v346
  %v501 = vpop.f32.mrf.mxu0
  %v502 = vadd.f32 %v433, %v501
  %503 = vmatmul.f32.gmra.mxu0 %v347
  %v504 = vpop.f32.mrf.mxu0
  %v505 = vadd.f32 %v438, %v504
  %506 = vmatmul.f32.gmra.mxu0 %v348
  %v507 = vpop.f32.mrf.mxu0
  %v508 = vadd.f32 %v443, %v507
  %509 = vdwg.mxu0
  %v510 = vmax.f32 %v463, 0.0
  %v511 = vmax.f32 %v466, 0.0
  %v512 = vmax.f32 %v469, 0.0
  %v513 = vmax.f32 %v472, 0.0
  %v514 = vmax.f32 %v475, 0.0
  %v515 = vmax.f32 %v478, 0.0
  %v516 = vmax.f32 %v481, 0.0
  %v517 = vmax.f32 %v484, 0.0
  %v518 = vmax.f32 %v487, 0.0
  %v519 = vmax.f32 %v490, 0.0
  %v520 = vmax.f32 %v493, 0.0
  %v521 = vmax.f32 %v496, 0.0
  %v522 = vmax.f32 %v499, 0.0
  %v523 = vmax.f32 %v502, 0.0
  %v524 = vmax.f32 %v505, 0.0
  %v525 = vmax.f32 %v508, 0.0
  %v526 = vld [vmem:[%s5] sm:$0xff]
  %v527 = vld [vmem:[%s5 + $0x8] sm:$0xff]
  %v528 = vld [vmem:[%s5 + $0x10] sm:$0xff]
  %v529 = vld [vmem:[%s5 + $0x18] sm:$0xff]
  %v530 = vld [vmem:[%s5 + $0x20] sm:$0xff]
  %v531 = vld [vmem:[%s5 + $0x28] sm:$0xff]
  %v532 = vld [vmem:[%s5 + $0x30] sm:$0xff]
  %v533 = vld [vmem:[%s5 + $0x38] sm:$0xff]
  %v534 = vld [vmem:[%s5 + $0x40] sm:$0xff]
  %v535 = vld [vmem:[%s5 + $0x48] sm:$0xff]
  %v536 = vld [vmem:[%s5 + $0x50] sm:$0xff]
  %v537 = vld [vmem:[%s5 + $0x58] sm:$0xff]
  %v538 = vld [vmem:[%s5 + $0x60] sm:$0xff]
  %v539 = vld [vmem:[%s5 + $0x68] sm:$0xff]
  %v540 = vld [vmem:[%s5 + $0x70] sm:$0xff]
  %v541 = vld [vmem:[%s5 + $0x78] sm:$0xff]
  %543 = vset.pattern.permute.xlu0 0
  %544 = vperm.xlu0 %543, %v526
  %v545 = vpop.permute.xlu0 %544
  %548 = vset.pattern.permute.xlu0 0
  %549 = vperm.xlu0 %548, %v527
  %v550 = vpop.permute.xlu0 %549
  %553 = vset.pattern.permute.xlu0 0
  %554 = vperm.xlu0 %553, %v528
  %v555 = vpop.permute.xlu0 %554
  %558 = vset.pattern.permute.xlu0 0
  %559 = vperm.xlu0 %558, %v529
  %v560 = vpop.permute.xlu0 %559
  %563 = vset.pattern.permute.xlu0 0
  %564 = vperm.xlu0 %563, %v530
  %v565 = vpop.permute.xlu0 %564
  %568 = vset.pattern.permute.xlu0 0
  %569 = vperm.xlu0 %568, %v531
  %v570 = vpop.permute.xlu0 %569
  %573 = vset.pattern.permute.xlu0 0
  %574 = vperm.xlu0 %573, %v532
  %v575 = vpop.permute.xlu0 %574
  %578 = vset.pattern.permute.xlu0 0
  %579 = vperm.xlu0 %578, %v533
  %v580 = vpop.permute.xlu0 %579
  %583 = vset.pattern.permute.xlu0 0
  %584 = vperm.xlu0 %583, %v534
  %v585 = vpop.permute.xlu0 %584
  %588 = vset.pattern.permute.xlu0 0
  %589 = vperm.xlu0 %588, %v535
  %v590 = vpop.permute.xlu0 %589
  %593 = vset.pattern.permute.xlu0 0
  %594 = vperm.xlu0 %593, %v536
  %v595 = vpop.permute.xlu0 %594
  %598 = vset.pattern.permute.xlu0 0
  %599 = vperm.xlu0 %598, %v537
  %v600 = vpop.permute.xlu0 %599
  %603 = vset.pattern.permute.xlu0 0
  %604 = vperm.xlu0 %603, %v538
  %v605 = vpop.permute.xlu0 %604
  %608 = vset.pattern.permute.xlu0 0
  %609 = vperm.xlu0 %608, %v539
  %v610 = vpop.permute.xlu0 %609
  %613 = vset.pattern.permute.xlu0 0
  %614 = vperm.xlu0 %613, %v540
  %v615 = vpop.permute.xlu0 %614
  %618 = vset.pattern.permute.xlu0 0
  %619 = vperm.xlu0 %618, %v541
  %v620 = vpop.permute.xlu0 %619
  %v622 = vmul.f32 %v545, %v510
  %v623 = vmul.f32 %v550, %v511
  %v624 = vmul.f32 %v555, %v512
  %v625 = vmul.f32 %v560, %v513
  %v626 = vmul.f32 %v565, %v514
  %v627 = vmul.f32 %v570, %v515
  %v628 = vmul.f32 %v575, %v516
  %v629 = vmul.f32 %v580, %v517
  %v630 = vmul.f32 %v585, %v518
  %v631 = vmul.f32 %v590, %v519
  %v632 = vmul.f32 %v595, %v520
  %v633 = vmul.f32 %v600, %v521
  %v634 = vmul.f32 %v605, %v522
  %v635 = vmul.f32 %v610, %v523
  %v636 = vmul.f32 %v615, %v524
  %v637 = vmul.f32 %v620, %v525
  %v638 = vadd.f32 %v622, %v623
  %v639 = vadd.f32 %v638, %v624
  %v640 = vadd.f32 %v639, %v625
  %v641 = vadd.f32 %v640, %v626
  %v642 = vadd.f32 %v641, %v627
  %v643 = vadd.f32 %v642, %v628
  %v644 = vadd.f32 %v643, %v629
  %v645 = vadd.f32 %v644, %v630
  %v646 = vadd.f32 %v645, %v631
  %v647 = vadd.f32 %v646, %v632
  %v648 = vadd.f32 %v647, %v633
  %v649 = vadd.f32 %v648, %v634
  %v650 = vadd.f32 %v649, %v635
  %v651 = vadd.f32 %v650, %v636
  %v652 = vadd.f32 %v651, %v637
  %v653 = vrot.slane %v652, 4
  %v654 = vadd.f32 %v652, %v653
  %v655 = vrot.slane %v654, 2
  %v656 = vadd.f32 %v654, %v655
  %v657 = vrot.slane %v656, 1
  %v658 = vadd.f32 %v656, %v657
  %s659 = sld [smem:[#allocation2]]
  %v660 = vstv %s659
  %v661 = vadd.f32 %v658, %v660
  %662 = vst [vmem:[%s7] sm:$0x1] %v661
  // Predicated region
  $region30: #{critic_forward.1} parent=0 // pred_check
    _
  $region31: #{critic_forward.1} parent=0 // pred_check_branch
    %664 = sbr.rel (0) target = $region33
  $region32: #{critic_forward.1} parent=0 // pred_region
    _
  $region33: #{critic_forward.1} parent=0 // pred_fallthru
    _
  // Predicated region
  $region34: #{critic_forward.1} parent=0 // pred_check
    _
  $region35: #{critic_forward.1} parent=0 // pred_check_branch
    %666 = sbr.rel (0) target = $region37
  $region36: #{critic_forward.1} parent=0 // pred_region
    _
  $region37: #{critic_forward.1} parent=0 // pred_fallthru
    _

</llo_original>
